<compile_context>
chip_gen: v6e
topology: v6e:2x2x1
jax: 0.10.0
libtpu: 0.0.40
codegen_flags: <defaults>
</compile_context>

<pallas_src>
import numpy as np
import jax
import jax.numpy as jnp
from jax import lax
from jax.experimental import pallas as pl
from jax.experimental.pallas import tpu as pltpu


# ----------------- host-side constant matrices (numpy, deterministic) -------

def _adaptive_pool_matrix(in_size, out_size):
    """A[out_size, in_size]: PyTorch AdaptiveAvgPool1d bin-averaging matrix."""
    A = np.zeros((out_size, in_size), np.float32)
    for i in range(out_size):
        start = (i * in_size) // out_size
        end = -((-(i + 1) * in_size) // out_size)          # ceil((i+1)*in/out)
        A[i, start:end] = 1.0 / float(end - start)
    return A


def _bilinear_matrix(out_size, in_size):
    """U[out_size, in_size]: 1-D bilinear interpolation, align_corners=True."""
    U = np.zeros((out_size, in_size), np.float32)
    for y in range(out_size):
        if in_size == 1:
            U[y, 0] = 1.0
            continue
        src = y * (in_size - 1) / (out_size - 1) if out_size > 1 else 0.0
        y0 = min(int(np.floor(src)), in_size - 1)
        y1 = min(y0 + 1, in_size - 1)
        w = src - y0
        U[y, y0] += 1.0 - w
        U[y, y1] += w
    return U


# ------------------------------ Pallas kernels -------------------------------

def _pool_conv_kernel(x_ref, k_ref, w_ref, s_ref, b_ref, m_ref,
                      fbd_ref, acc_ref):
    """Adaptive avg-pool (all branches, one matmul/tile, accumulated over row
    tiles) + fused 1x1 conv + folded BN + ReLU into block-diagonal features."""
    t = pl.program_id(1)
    nt = pl.num_programs(1)

    @pl.when(t == 0)
    def _():
        acc_ref[...] = jnp.zeros_like(acc_ref)

    _, th, w, c = x_ref.shape
    kp = k_ref.shape[-1]
    x2 = x_ref[0].reshape(th * w, c)          # [tile_pixels, C]
    k2 = k_ref[...].reshape(th * w, kp)       # [tile_pixels, sum(p^2)]
    # acc[r, c] += sum_pixels K[pixel, r] * x[pixel, c]   (single wide matmul)
    acc_ref[...] += lax.dot_general(
        k2, x2, (((0,), (0,)), ((), ())), preferred_element_type=jnp.float32)

    @pl.when(t == nt - 1)
    def _():
        # Fused 1x1 convs of all branches (one matmul), folded BN, ReLU.
        z = jnp.dot(acc_ref[...], w_ref[...],
                    preferred_element_type=jnp.float32)
        z = z * s_ref[...] + b_ref[...]
        # Block-diagonal mask keeps each branch's rows tied to its channels.
        fbd_ref[0] = jnp.maximum(z, 0.0) * m_ref[...]


def _upsample_concat_kernel(x_ref, u_ref, f_ref, o_ref):
    """Bilinear upsample (align_corners=True) of all branches as one matmul
    against the block-diagonal branch features, fused with concat([x, ...])."""
    _, th, w, c = x_ref.shape
    kp = u_ref.shape[-1]
    c4 = f_ref.shape[-1]
    x = x_ref[0]                                  # [TH, W, C]
    u2 = u_ref[...].reshape(th * w, kp)           # [tile_pixels, sum(p^2)]
    up = jnp.dot(u2, f_ref[0], preferred_element_type=jnp.float32)
    o_ref[0] = jnp.concatenate(
        [x, up.reshape(th, w, c4)], axis=-1).astype(o_ref.dtype)


# ------------------------------ wrapper ---------------------------------

def pyramid_pooling_pallas(x_nhwc, weights, scales, biases, pool_sizes,
                           *, tile_h=8):
    """x_nhwc: [N, H, W, C] f32.  weights[k]: [C, Cout]; scales/biases[k]: [Cout]."""
    N, H, W, C = x_nhwc.shape
    n_branch = len(pool_sizes)
    cout = weights[0].shape[1]
    c4 = cout * n_branch
    kp = int(sum(p * p for p in pool_sizes))

    # Precompute pooling / interpolation slabs and the block-diagonal mask.
    k_all = np.zeros((H, W, kp), np.float32)
    u_all = np.zeros((H, W, kp), np.float32)
    mask = np.zeros((kp, c4), np.float32)
    off = 0
    for k, p in enumerate(pool_sizes):
        ah = _adaptive_pool_matrix(H, p)           # [p, H]
        aw = _adaptive_pool_matrix(W, p)           # [p, W]
        uh = _bilinear_matrix(H, p)                # [H, p]
        uw = _bilinear_matrix(W, p)                # [W, p]
        k_all[:, :, off:off + p * p] = np.einsum(
            'ih,jw->hwij', ah, aw).reshape(H, W, p * p)
        u_all[:, :, off:off + p * p] = np.einsum(
            'hi,wj->hwij', uh, uw).reshape(H, W, p * p)
        mask[off:off + p * p, k * cout:(k + 1) * cout] = 1.0
        off += p * p

    w_all = jnp.concatenate(weights, axis=1)              # [C, 4*Cout]
    s_all = jnp.concatenate(scales).reshape(1, c4)
    b_all = jnp.concatenate(biases).reshape(1, c4)
    k_all = jnp.asarray(k_all)
    u_all = jnp.asarray(u_all)
    m_all = jnp.asarray(mask)

    TH = tile_h
    assert H % TH == 0 and TH % 8 == 0
    grid = (N, H // TH)
    # NOTE: tiny footprint here; at real PSPNet shapes re-derive the row tile
    # from 64 MiB physical VMEM on v7x (vs 128 MiB on v5e/v6e).
    vmem_limit = 32 * 1024 * 1024

    # Pass 1: pooled + conv + BN + ReLU branch features (block-diagonal).
    fbd = pl.pallas_call(
        _pool_conv_kernel,
        out_shape=jax.ShapeDtypeStruct((N, kp, c4), jnp.float32),
        grid_spec=pltpu.PrefetchScalarGridSpec(
            num_scalar_prefetch=0, grid=grid,
            in_specs=[
                pl.BlockSpec((1, TH, W, C), lambda n, t: (n, t, 0, 0)),
                pl.BlockSpec((TH, W, kp), lambda n, t: (t, 0, 0)),
                pl.BlockSpec((C, c4), lambda n, t: (0, 0)),        # resident
                pl.BlockSpec((1, c4), lambda n, t: (0, 0)),        # resident
                pl.BlockSpec((1, c4), lambda n, t: (0, 0)),        # resident
                pl.BlockSpec((kp, c4), lambda n, t: (0, 0)),       # resident
            ],
            out_specs=pl.BlockSpec((1, kp, c4), lambda n, t: (n, 0, 0)),
            scratch_shapes=[pltpu.VMEM((kp, C), jnp.float32)]),
        compiler_params=pltpu.CompilerParams(
            dimension_semantics=("parallel", "arbitrary"),
            vmem_limit_bytes=vmem_limit),
    )(x_nhwc, k_all, w_all, s_all, b_all, m_all)

    # Pass 2: bilinear upsample of all branches + concat with x, tiled & pipelined.
    out = pl.pallas_call(
        _upsample_concat_kernel,
        out_shape=jax.ShapeDtypeStruct((N, H, W, C + c4), jnp.float32),
        grid_spec=pltpu.PrefetchScalarGridSpec(
            num_scalar_prefetch=0, grid=grid,
            in_specs=[
                pl.BlockSpec((1, TH, W, C), lambda n, t: (n, t, 0, 0)),
                pl.BlockSpec((TH, W, kp), lambda n, t: (t, 0, 0)),
                pl.BlockSpec((1, kp, c4), lambda n, t: (n, 0, 0)),  # resident per n
            ],
            out_specs=pl.BlockSpec((1, TH, W, C + c4),
                                   lambda n, t: (n, t, 0, 0))),
        compiler_params=pltpu.CompilerParams(
            dimension_semantics=("parallel", "parallel"),
            vmem_limit_bytes=vmem_limit),
    )(x_nhwc, u_all, fbd)
    return out


# ------------------------- reference (pure JAX) -------------------------

def _ref_adaptive_avg_pool(x, p):
    N, H, W, C = x.shape
    rows = []
    for i in range(p):
        hs = (i * H) // p
        he = -((-(i + 1) * H) // p)
        cols = []
        for j in range(p):
            ws = (j * W) // p
            we = -((-(j + 1) * W) // p)
            cols.append(jnp.mean(x[:, hs:he, ws:we, :], axis=(1, 2)))
        rows.append(jnp.stack(cols, axis=1))
    return jnp.stack(rows, axis=1)                  # [N, p, p, C]


def _ref_bilinear_align_corners(z, out_h, out_w):
    def interp(arr, out_size, axis):
        in_size = arr.shape[axis]
        if in_size == 1:
            idx0 = np.zeros(out_size, np.int32)
            idx1 = idx0
            wts = np.zeros(out_size, np.float32)
        else:
            src = np.arange(out_size) * (in_size - 1) / (out_size - 1)
            idx0 = np.minimum(np.floor(src).astype(np.int32), in_size - 1)
            idx1 = np.minimum(idx0 + 1, in_size - 1)
            wts = (src - idx0).astype(np.float32)
        a0 = jnp.take(arr, idx0, axis=axis)
        a1 = jnp.take(arr, idx1, axis=axis)
        shp = [1] * arr.ndim
        shp[axis] = out_size
        wj = jnp.asarray(wts).reshape(shp)
        return a0 * (1.0 - wj) + a1 * wj
    z = interp(z, out_h, axis=1)
    z = interp(z, out_w, axis=2)
    return z


def ref_pyramid_pooling(x_nhwc, weights, scales, biases, pool_sizes):
    N, H, W, C = x_nhwc.shape
    outs = [x_nhwc]
    for p, w, s, b in zip(pool_sizes, weights, scales, biases):
        pooled = _ref_adaptive_avg_pool(x_nhwc, p)
        z = jnp.einsum('nijc,co->nijo', pooled, w) * s + b
        z = jnp.maximum(z, 0.0)
        outs.append(_ref_bilinear_align_corners(z, H, W))
    return jnp.concatenate(outs, axis=-1)


# ------------------------------ demo / test ------------------------------

if __name__ == "__main__":
    # Small shapes consistent with the module: batch=2, in_channels=16,
    # spatial=16x16, pool_sizes=(6,3,2,1) -> out_channels per branch = 4.
    N, C, H, W = 2, 16, 16, 16
    pool_sizes = (6, 3, 2, 1)
    Cout = C // len(pool_sizes)

    key = jax.random.PRNGKey(0)
    ks = jax.random.split(key, 2 + 5 * len(pool_sizes))

    # Input in PyTorch's NCHW convention, converted to NHWC for the kernels.
    x_nchw = jax.random.normal(ks[0], (N, C, H, W), jnp.float32)
    x_nhwc = jnp.transpose(x_nchw, (0, 2, 3, 1))

    weights, scales, biases = [], [], []
    for k in range(len(pool_sizes)):
        kw, kg, kb, km, kv = ks[2 + 5 * k: 2 + 5 * (k + 1)]
        w = 0.1 * jax.random.normal(kw, (C, Cout), jnp.float32)   # 1x1 conv
        gamma = 0.5 + jax.random.uniform(kg, (Cout,), jnp.float32)
        beta = 0.1 * jax.random.normal(kb, (Cout,), jnp.float32)
        mean = 0.1 * jax.random.normal(km, (Cout,), jnp.float32)
        var = 0.5 + jax.random.uniform(kv, (Cout,), jnp.float32)
        s = gamma / jnp.sqrt(var + 1e-5)                          # folded BN
        b = beta - mean * s
        weights.append(w)
        scales.append(s)
        biases.append(b)

    out = pyramid_pooling_pallas(x_nhwc, weights, scales, biases, pool_sizes)
    out = jax.block_until_ready(out)

    ref = jax.block_until_ready(
        ref_pyramid_pooling(x_nhwc, weights, scales, biases, pool_sizes))
    np.testing.assert_allclose(np.asarray(out), np.asarray(ref),
                               rtol=1e-3, atol=1e-3)

    print("KERNEL_OK")
</pallas_src>

<mosaic_0001>
module attributes {stable_mosaic.version = 11 : i64} {
  func.func @_pool_conv_kernel(%arg0: i32, %arg1: i32, %arg2: memref<1x8x16x16xf32, #tpu.memory_space<vmem>>, %arg3: memref<8x16x50xf32, #tpu.memory_space<vmem>>, %arg4: memref<16x16xf32, #tpu.memory_space<vmem>>, %arg5: memref<1x16xf32, #tpu.memory_space<vmem>>, %arg6: memref<1x16xf32, #tpu.memory_space<vmem>>, %arg7: memref<50x16xf32, #tpu.memory_space<vmem>>, %arg8: memref<1x50x16xf32, #tpu.memory_space<vmem>>, %arg9: memref<50x16xf32, #tpu.memory_space<vmem>>) attributes {dimension_semantics = [#tpu.dimension_semantics<parallel>, #tpu.dimension_semantics<arbitrary>], iteration_bounds = array<i64: 2, 2>, scalar_prefetch = 0 : i64, scratch_operands = 1 : i64, tpu.core_type = #tpu.core_type<tc>, window_params = [{transform_indices = @transform_0, window_bounds = array<i64: 1, 8, 16, 16>}, {transform_indices = @transform_1, window_bounds = array<i64: 8, 16, 50>}, {pipeline_mode = #tpu.pipeline_mode<synchronous>, transform_indices = @transform_2, window_bounds = array<i64: 16, 16>}, {pipeline_mode = #tpu.pipeline_mode<synchronous>, transform_indices = @transform_3, window_bounds = array<i64: 1, 16>}, {pipeline_mode = #tpu.pipeline_mode<synchronous>, transform_indices = @transform_4, window_bounds = array<i64: 1, 16>}, {pipeline_mode = #tpu.pipeline_mode<synchronous>, transform_indices = @transform_5, window_bounds = array<i64: 50, 16>}, {transform_indices = @transform_6, window_bounds = array<i64: 1, 50, 16>}]} {
    %c0_i32 = arith.constant 0 : i32
    %0 = arith.cmpi eq, %arg1, %c0_i32 : i32
    %1 = arith.extui %0 : i1 to i32
    %c0_i32_0 = arith.constant 0 : i32
    %2 = arith.cmpi ne, %1, %c0_i32_0 : i32
    scf.if %2 {
      %cst_12 = arith.constant 0.000000e+00 : f32
      %15 = vector.broadcast %cst_12 : f32 to vector<50x16xf32>
      %c0_13 = arith.constant 0 : index
      %c0_14 = arith.constant 0 : index
      %16 = vector.load %arg9[%c0_13, %c0_14] : memref<50x16xf32, #tpu.memory_space<vmem>>, vector<50x16xf32>
      tpu.vector_store %arg9[%c0_13, %c0_14], %15 {strides = array<i32>} : memref<50x16xf32, #tpu.memory_space<vmem>>, vector<50x16xf32>,
    } else {
    }
    %c0 = arith.constant 0 : index
    %c0_1 = arith.constant 0 : index
    %c0_2 = arith.constant 0 : index
    %c0_3 = arith.constant 0 : index
    %3 = vector.load %arg2[%c0, %c0_1, %c0_2, %c0_3] : memref<1x8x16x16xf32, #tpu.memory_space<vmem>>, vector<1x8x16x16xf32>
    %4 = vector.shape_cast %3 : vector<1x8x16x16xf32> to vector<8x16x16xf32>
    %5 = vector.shape_cast %4 : vector<8x16x16xf32> to vector<128x16xf32>
    %c0_4 = arith.constant 0 : index
    %c0_5 = arith.constant 0 : index
    %c0_6 = arith.constant 0 : index
    %6 = vector.load %arg3[%c0_4, %c0_5, %c0_6] : memref<8x16x50xf32, #tpu.memory_space<vmem>>, vector<8x16x50xf32>
    %7 = vector.shape_cast %6 : vector<8x16x50xf32> to vector<128x50xf32>
    %c0_7 = arith.constant 0 : index
    %c0_8 = arith.constant 0 : index
    %8 = vector.load %arg9[%c0_7, %c0_8] : memref<50x16xf32, #tpu.memory_space<vmem>>, vector<50x16xf32>
    %cst = arith.constant dense<0.000000e+00> : vector<50x16xf32>
    %9 = tpu.matmul %7, %5, %cst {dimension_numbers = #tpu.dot_dimension_numbers<[0], [0], [1], [1], [0, 1, 1, 1], [], []>} : vector<128x50xf32>, vector<128x16xf32>, vector<50x16xf32> -> vector<50x16xf32>
    %10 = arith.addf %8, %9 : vector<50x16xf32>
    %c0_9 = arith.constant 0 : index
    %c0_10 = arith.constant 0 : index
    %11 = vector.load %arg9[%c0_9, %c0_10] : memref<50x16xf32, #tpu.memory_space<vmem>>, vector<50x16xf32>
    tpu.vector_store %arg9[%c0_9, %c0_10], %10 {strides = array<i32>} : memref<50x16xf32, #tpu.memory_space<vmem>>, vector<50x16xf32>,
    %c1_i32 = arith.constant 1 : i32
    %12 = arith.cmpi eq, %arg1, %c1_i32 : i32
    %13 = arith.extui %12 : i1 to i32
    %c0_i32_11 = arith.constant 0 : i32
    %14 = arith.cmpi ne, %13, %c0_i32_11 : i32
    scf.if %14 {
      %c0_12 = arith.constant 0 : index
      %c0_13 = arith.constant 0 : index
      %15 = vector.load %arg9[%c0_12, %c0_13] : memref<50x16xf32, #tpu.memory_space<vmem>>, vector<50x16xf32>
      %c0_14 = arith.constant 0 : index
      %c0_15 = arith.constant 0 : index
      %16 = vector.load %arg4[%c0_14, %c0_15] : memref<16x16xf32, #tpu.memory_space<vmem>>, vector<16x16xf32>
      %cst_16 = arith.constant dense<0.000000e+00> : vector<50x16xf32>
      %17 = tpu.matmul %15, %16, %cst_16 {dimension_numbers = #tpu.dot_dimension_numbers<[1], [0], [0], [1], [0, 0, 1, 1], [], []>} : vector<50x16xf32>, vector<16x16xf32>, vector<50x16xf32> -> vector<50x16xf32>
      %c0_17 = arith.constant 0 : index
      %c0_18 = arith.constant 0 : index
      %18 = vector.load %arg5[%c0_17, %c0_18] : memref<1x16xf32, #tpu.memory_space<vmem>>, vector<1x16xf32>
      %19 = vector.broadcast %18 : vector<1x16xf32> to vector<50x16xf32>
      %20 = arith.mulf %17, %19 : vector<50x16xf32>
      %c0_19 = arith.constant 0 : index
      %c0_20 = arith.constant 0 : index
      %21 = vector.load %arg6[%c0_19, %c0_20] : memref<1x16xf32, #tpu.memory_space<vmem>>, vector<1x16xf32>
      %22 = vector.broadcast %21 : vector<1x16xf32> to vector<50x16xf32>
      %23 = arith.addf %20, %22 : vector<50x16xf32>
      %cst_21 = arith.constant 0.000000e+00 : f32
      %24 = vector.broadcast %cst_21 : f32 to vector<50x16xf32>
      %25 = arith.maximumf %23, %24 : vector<50x16xf32>
      %c0_22 = arith.constant 0 : index
      %c0_23 = arith.constant 0 : index
      %26 = vector.load %arg7[%c0_22, %c0_23] : memref<50x16xf32, #tpu.memory_space<vmem>>, vector<50x16xf32>
      %27 = arith.mulf %25, %26 : vector<50x16xf32>
      %c0_24 = arith.constant 0 : index
      %c0_25 = arith.constant 0 : index
      %c0_26 = arith.constant 0 : index
      %28 = vector.load %arg8[%c0_24, %c0_25, %c0_26] : memref<1x50x16xf32, #tpu.memory_space<vmem>>, vector<1x50x16xf32>
      %29 = vector.shape_cast %28 : vector<1x50x16xf32> to vector<50x16xf32>
      %30 = vector.shape_cast %27 : vector<50x16xf32> to vector<1x50x16xf32>
      tpu.vector_store %arg8[%c0_24, %c0_25, %c0_26], %30 {strides = array<i32>} : memref<1x50x16xf32, #tpu.memory_space<vmem>>, vector<1x50x16xf32>,
    } else {
    }
    return
  }
  func.func @transform_0(%arg0: i32, %arg1: i32) -> (i32, i32, i32, i32) {
    %c0_i32 = arith.constant 0 : i32
    %c0_i32_0 = arith.constant 0 : i32
    %c0_i32_1 = arith.constant 0 : i32
    return %arg0, %arg1, %c0_i32, %c0_i32_0 : i32, i32, i32, i32
  }
  func.func @transform_1(%arg0: i32, %arg1: i32) -> (i32, i32, i32) {
    %c0_i32 = arith.constant 0 : i32
    %c0_i32_0 = arith.constant 0 : i32
    %c0_i32_1 = arith.constant 0 : i32
    return %arg1, %c0_i32, %c0_i32_0 : i32, i32, i32
  }
  func.func @transform_2(%arg0: i32, %arg1: i32) -> (i32, i32) {
    %c0_i32 = arith.constant 0 : i32
    %c0_i32_0 = arith.constant 0 : i32
    %c0_i32_1 = arith.constant 0 : i32
    return %c0_i32, %c0_i32_0 : i32, i32
  }
  func.func @transform_3(%arg0: i32, %arg1: i32) -> (i32, i32) {
    %c0_i32 = arith.constant 0 : i32
    %c0_i32_0 = arith.constant 0 : i32
    %c0_i32_1 = arith.constant 0 : i32
    return %c0_i32, %c0_i32_0 : i32, i32
  }
  func.func @transform_4(%arg0: i32, %arg1: i32) -> (i32, i32) {
    %c0_i32 = arith.constant 0 : i32
    %c0_i32_0 = arith.constant 0 : i32
    %c0_i32_1 = arith.constant 0 : i32
    return %c0_i32, %c0_i32_0 : i32, i32
  }
  func.func @transform_5(%arg0: i32, %arg1: i32) -> (i32, i32) {
    %c0_i32 = arith.constant 0 : i32
    %c0_i32_0 = arith.constant 0 : i32
    %c0_i32_1 = arith.constant 0 : i32
    return %c0_i32, %c0_i32_0 : i32, i32
  }
  func.func @transform_6(%arg0: i32, %arg1: i32) -> (i32, i32, i32) {
    %c0_i32 = arith.constant 0 : i32
    %c0_i32_0 = arith.constant 0 : i32
    %c0_i32_1 = arith.constant 0 : i32
    return %arg0, %c0_i32, %c0_i32_0 : i32, i32, i32
  }
}

</mosaic_0001>

<llo_original>
// kernel: tpu_custom_call.1
$region0: #{tpu_custom_call.1}
  #allocation0 [shape = 'u32[]', space=smem, size = 0x4, offset = 0x4, fixed_abs, tag = 'smem constant byte address 0x4 - core index']
  #allocation1 [shape = 'u32[144,128]{1,0:T(1,128)}', space=vmem, size = 0x12000, scoped, tag = 'internal scratch']
  #allocation2 [shape = 'f32[50,16]{1,0:T(8,128)}', space=vmem, size = 0x7000, scoped, tag = 'scratch operand']
  %s0 = inlined_call_operand.hbm [shape: f32[2,16,16,16], index: 0, kind: input, shape index: {}]
  %s1 = inlined_call_operand.hbm [shape: f32[16,16,50], index: 1, kind: input, shape index: {}]
  %s2 = inlined_call_operand.vmem [shape: f32[16,16], index: 2, kind: input, shape index: {}]
  %s3 = inlined_call_operand.vmem [shape: f32[1,16], index: 3, kind: input, shape index: {}]
  %s4 = inlined_call_operand.vmem [shape: f32[1,16], index: 4, kind: input, shape index: {}]
  %s5 = inlined_call_operand.vmem [shape: f32[50,16], index: 5, kind: input, shape index: {}]
  %s6 = inlined_call_operand.vmem [shape: f32[2,50,16], index: 6, kind: output, shape index: {}]
  %s7 = sld [smem:[#allocation0]]
  $region73: #{tpu_custom_call.1} parent=0
    _
  %s9 = ssub.s32 1, %s7
  %s10 = scalar_select 0, %s9, %s7
  $region1: #{tpu_custom_call.1} parent=0
    #allocation3 [shape = 'u8[131072]{0}', space=vmem, size = 0x20000, scoped, tag = 'input window, operand 0']
    #allocation4 [shape = 's32[2]{0}', space=sflag, size = 0x8, scoped, tag = 'scoped memory for tpu_custom_call.1']
    #allocation5 [shape = 'u8[131072]{0}', space=vmem, size = 0x20000, scoped, tag = 'input window, operand 1']
    #allocation6 [shape = 's32[2]{0}', space=sflag, size = 0x8, scoped, tag = 'scoped memory for tpu_custom_call.1']
    %11 = vsyncpa [#allocation4], 0
    %s12 = scalar_lea.sflag [#allocation4], 1
    %13 = vsyncpa %s12, 0
    %14 = vsyncpa [#allocation6], 0
    %s15 = scalar_lea.sflag [#allocation6], 1
    %16 = vsyncpa %s15, 0
    loop: start=0, step=1, limit=6
    $region2: #{tpu_custom_call.1} parent=1 // loop_pre_header
      _
    $region3: #{tpu_custom_call.1} parent=1 // loop_header
      %s18 = sphi 0, %s22
      %p19 = scmp.ge.s32.totalorder %s18, 6
      %s25 = sphi 0, %s37
      %s26 = sphi 0, %s33
      %s27 = sphi 0, %s25
      %s28 = sphi 0, %s26
      %s29 = sphi 0, %s27
      %s30 = sphi 0, %s28
      %s42 = sphi 0, %s44
      %s45 = sphi 0, %s42
      %s46 = sphi 0, %s45
      %s62 = sphi 0, %s46
      %s68 = sphi 0, %s70
      %s71 = sphi 0, %s68
      %s72 = sphi 0, %s71
      %s88 = sphi 0, %s72
      %s92 = sphi 0, %s92
      %s94 = sphi 0, %s92
      %s95 = sphi 0, %s94
      %s109 = sphi 0, %s95
      %s113 = sphi 0, %s113
      %s115 = sphi 0, %s113
      %s116 = sphi 0, %s115
      %s130 = sphi 0, %s116
      %s134 = sphi 0, %s134
      %s136 = sphi 0, %s134
      %s137 = sphi 0, %s136
      %s151 = sphi 0, %s137
      %s155 = sphi 0, %s155
      %s157 = sphi 0, %s155
      %s158 = sphi 0, %s157
      %s172 = sphi 0, %s158
      %s178 = sphi 0, %s180
      %s181 = sphi 0, %s178
      %s182 = sphi 0, %s181
      %s198 = sphi 0, %s182
    $region4: #{tpu_custom_call.1} parent=1 // loop_header_branch
      %21 = sbr.rel (%p19) target = $region8
    $region5: #{tpu_custom_call.1} parent=1 // loop_body
      %s23 = ssub.s32 %s18, 1
      %s24 = ssub.s32 %s18, 2
      %s31 = sadd.s32 1, %s26
      %p32 = scmp.ge.s32.totalorder %s31, 2
      %s33 = scalar_select %p32, 0, %s31
      %s34 = sadd.s32 1, %s25
      %s35 = scalar_select %p32, %s34, %s25
      %p36 = scmp.ge.s32.totalorder %s35, 2
      %s37 = scalar_select %p36, 0, %s35
      %s38 = ssub.s32 %s25, %s37
      %s39 = ssub.s32 %s26, %s33
      %s40 = sor.u32 %s38, %s39
      %p41 = scmp.eq.s32.totalorder %s40, 0
      %s43 = sadd.s32 %s42, 1
      %s44 = scalar_select %p41, %s42, %s43
      %p47 = pneg %p41
      %p48 = scmp.eq.s32.totalorder %s18, 3
      %p49 = por %p47, %p48
      %p50 = scmp.ne.s32.totalorder %s42, %s45
      %p51 = scmp.eq.s32.totalorder %s18, 0
      %p52 = por %p50, %p51
      %p53 = scmp.ne.s32.totalorder %s42, %s45
      %p54 = scmp.eq.s32.totalorder %s23, 3
      %p55 = por %p53, %p54
      %p56 = scmp.ne.s32.totalorder %s45, %s46
      %p57 = scmp.eq.s32.totalorder %s23, 0
      %p58 = por %p56, %p57
      %p59 = scmp.ne.s32.totalorder %s45, %s46
      %p60 = scmp.eq.s32.totalorder %s24, 3
      %p61 = por %p59, %p60
      %p63 = scmp.ne.s32.totalorder %s46, %s62
      %p64 = scmp.eq.s32.totalorder %s24, 0
      %p65 = por %p63, %p64
      %s66 = ssub.s32 %s26, %s33
      %p67 = scmp.eq.s32.totalorder %s66, 0
      %s69 = sadd.s32 %s68, 1
      %s70 = scalar_select %p67, %s68, %s69
      %p73 = pneg %p67
      %p74 = scmp.eq.s32.totalorder %s18, 3
      %p75 = por %p73, %p74
      %p76 = scmp.ne.s32.totalorder %s68, %s71
      %p77 = scmp.eq.s32.totalorder %s18, 0
      %p78 = por %p76, %p77
      %p79 = scmp.ne.s32.totalorder %s68, %s71
      %p80 = scmp.eq.s32.totalorder %s23, 3
      %p81 = por %p79, %p80
      %p82 = scmp.ne.s32.totalorder %s71, %s72
      %p83 = scmp.eq.s32.totalorder %s23, 0
      %p84 = por %p82, %p83
      %p85 = scmp.ne.s32.totalorder %s71, %s72
      %p86 = scmp.eq.s32.totalorder %s24, 3
      %p87 = por %p85, %p86
      %p89 = scmp.ne.s32.totalorder %s72, %s88
      %p90 = scmp.eq.s32.totalorder %s24, 0
      %p91 = por %p89, %p90
      %s93 = sadd.s32 %s92, 1
      %p96 = scmp.eq.s32.totalorder %s18, 3
      %p97 = scmp.ne.s32.totalorder %s92, %s94
      %p98 = scmp.eq.s32.totalorder %s18, 0
      %p99 = por %p97, %p98
      %p100 = scmp.ne.s32.totalorder %s92, %s94
      %p101 = scmp.eq.s32.totalorder %s23, 3
      %p102 = por %p100, %p101
      %p103 = scmp.ne.s32.totalorder %s94, %s95
      %p104 = scmp.eq.s32.totalorder %s23, 0
      %p105 = por %p103, %p104
      %p106 = scmp.ne.s32.totalorder %s94, %s95
      %p107 = scmp.eq.s32.totalorder %s24, 3
      %p108 = por %p106, %p107
      %p110 = scmp.ne.s32.totalorder %s95, %s109
      %p111 = scmp.eq.s32.totalorder %s24, 0
      %p112 = por %p110, %p111
      %s114 = sadd.s32 %s113, 1
      %p117 = scmp.eq.s32.totalorder %s18, 3
      %p118 = scmp.ne.s32.totalorder %s113, %s115
      %p119 = scmp.eq.s32.totalorder %s18, 0
      %p120 = por %p118, %p119
      %p121 = scmp.ne.s32.totalorder %s113, %s115
      %p122 = scmp.eq.s32.totalorder %s23, 3
      %p123 = por %p121, %p122
      %p124 = scmp.ne.s32.totalorder %s115, %s116
      %p125 = scmp.eq.s32.totalorder %s23, 0
      %p126 = por %p124, %p125
      %p127 = scmp.ne.s32.totalorder %s115, %s116
      %p128 = scmp.eq.s32.totalorder %s24, 3
      %p129 = por %p127, %p128
      %p131 = scmp.ne.s32.totalorder %s116, %s130
      %p132 = scmp.eq.s32.totalorder %s24, 0
      %p133 = por %p131, %p132
      %s135 = sadd.s32 %s134, 1
      %p138 = scmp.eq.s32.totalorder %s18, 3
      %p139 = scmp.ne.s32.totalorder %s134, %s136
      %p140 = scmp.eq.s32.totalorder %s18, 0
      %p141 = por %p139, %p140
      %p142 = scmp.ne.s32.totalorder %s134, %s136
      %p143 = scmp.eq.s32.totalorder %s23, 3
      %p144 = por %p142, %p143
      %p145 = scmp.ne.s32.totalorder %s136, %s137
      %p146 = scmp.eq.s32.totalorder %s23, 0
      %p147 = por %p145, %p146
      %p148 = scmp.ne.s32.totalorder %s136, %s137
      %p149 = scmp.eq.s32.totalorder %s24, 3
      %p150 = por %p148, %p149
      %p152 = scmp.ne.s32.totalorder %s137, %s151
      %p153 = scmp.eq.s32.totalorder %s24, 0
      %p154 = por %p152, %p153
      %s156 = sadd.s32 %s155, 1
      %p159 = scmp.eq.s32.totalorder %s18, 3
      %p160 = scmp.ne.s32.totalorder %s155, %s157
      %p161 = scmp.eq.s32.totalorder %s18, 0
      %p162 = por %p160, %p161
      %p163 = scmp.ne.s32.totalorder %s155, %s157
      %p164 = scmp.eq.s32.totalorder %s23, 3
      %p165 = por %p163, %p164
      %p166 = scmp.ne.s32.totalorder %s157, %s158
      %p167 = scmp.eq.s32.totalorder %s23, 0
      %p168 = por %p166, %p167
      %p169 = scmp.ne.s32.totalorder %s157, %s158
      %p170 = scmp.eq.s32.totalorder %s24, 3
      %p171 = por %p169, %p170
      %p173 = scmp.ne.s32.totalorder %s158, %s172
      %p174 = scmp.eq.s32.totalorder %s24, 0
      %p175 = por %p173, %p174
      %s176 = ssub.s32 %s25, %s37
      %p177 = scmp.eq.s32.totalorder %s176, 0
      %s179 = sadd.s32 %s178, 1
      %s180 = scalar_select %p177, %s178, %s179
      %p183 = pneg %p177
      %p184 = scmp.eq.s32.totalorder %s18, 3
      %p185 = por %p183, %p184
      %p186 = scmp.ne.s32.totalorder %s178, %s181
      %p187 = scmp.eq.s32.totalorder %s18, 0
      %p188 = por %p186, %p187
      %p189 = scmp.ne.s32.totalorder %s178, %s181
      %p190 = scmp.eq.s32.totalorder %s23, 3
      %p191 = por %p189, %p190
      %p192 = scmp.ne.s32.totalorder %s181, %s182
      %p193 = scmp.eq.s32.totalorder %s23, 0
      %p194 = por %p192, %p193
      %p195 = scmp.ne.s32.totalorder %s181, %s182
      %p196 = scmp.eq.s32.totalorder %s24, 3
      %p197 = por %p195, %p196
      %p199 = scmp.ne.s32.totalorder %s182, %s198
      %p200 = scmp.eq.s32.totalorder %s24, 0
      %p201 = por %p199, %p200
      %p202 = scmp.le.s32.totalorder 1, %s18
      %p203 = scmp.lt.s32.totalorder %s18, 5
      %p204 = pnand %p202, %p203
      %p205 = pneg %p204
      // Predicated region
      $region9: #{tpu_custom_call.1} parent=5 // pred_check
        _
      $region10: #{tpu_custom_call.1} parent=5 // pred_check_branch
        %207 = sbr.rel (%p204) target = $region12
      $region11: #{tpu_custom_call.1} parent=5 // pred_region
        %s208 = ssub.s32 %s18, 1
        // Predicated region
        $region13: #{tpu_custom_call.1} parent=11 // pred_check
          %p209 = pneg %p105
        $region14: #{tpu_custom_call.1} parent=11 // pred_check_branch
          %211 = sbr.rel (%p209) target = $region16
        $region15: #{tpu_custom_call.1} parent=11 // pred_region
          _
        $region16: #{tpu_custom_call.1} parent=11 // pred_fallthru
          _
        // Predicated region
        $region17: #{tpu_custom_call.1} parent=11 // pred_check
          %p212 = pneg %p126
        $region18: #{tpu_custom_call.1} parent=11 // pred_check_branch
          %214 = sbr.rel (%p212) target = $region20
        $region19: #{tpu_custom_call.1} parent=11 // pred_region
          _
        $region20: #{tpu_custom_call.1} parent=11 // pred_fallthru
          _
        // Predicated region
        $region21: #{tpu_custom_call.1} parent=11 // pred_check
          %p215 = pneg %p147
        $region22: #{tpu_custom_call.1} parent=11 // pred_check_branch
          %217 = sbr.rel (%p215) target = $region24
        $region23: #{tpu_custom_call.1} parent=11 // pred_region
          _
        $region24: #{tpu_custom_call.1} parent=11 // pred_fallthru
          _
        // Predicated region
        $region25: #{tpu_custom_call.1} parent=11 // pred_check
          %p218 = pneg %p168
        $region26: #{tpu_custom_call.1} parent=11 // pred_check_branch
          %220 = sbr.rel (%p218) target = $region28
        $region27: #{tpu_custom_call.1} parent=11 // pred_region
          _
        $region28: #{tpu_custom_call.1} parent=11 // pred_fallthru
          _
      $region12: #{tpu_custom_call.1} parent=5 // pred_fallthru
        _
      %p221 = scmp.lt.s32.totalorder %s18, 4
      // Predicated region
      $region29: #{tpu_custom_call.1} parent=5 // pred_check
        %p222 = pneg %p221
      $region30: #{tpu_custom_call.1} parent=5 // pred_check_branch
        %224 = sbr.rel (%p222) target = $region32
      $region31: #{tpu_custom_call.1} parent=5 // pred_region
        // Predicated region
        $region33: #{tpu_custom_call.1} parent=31 // pred_check
          %p225 = pneg %p52
        $region34: #{tpu_custom_call.1} parent=31 // pred_check_branch
          %227 = sbr.rel (%p225) target = $region36
        $region35: #{tpu_custom_call.1} parent=31 // pred_region
          %s228 = sand.u32 %s42, 1
          %s229 = scalar_lea.sflag [#allocation4], %s228
          %s230 = sand.u32 %s42, 1
          %s231 = smul.addr %s230, 128
          %s232 = scalar_lea.vmem [#allocation3], %s231
          %s233 = smul.u32 8, %s26
          %s235 = ssub.s32 2048, 2048
          %236 = vsyncadd %s229, %s235
          %s237 = smul.addr %s233, 2
          %s238 = smul.addr %s25, 32
          %s239 = sadd.s32 %s237, %s238
          %s240 = smul.addr %s239, 128
          %s241 = scalar_lea.hbm %s0, %s240
          %s242 = sshll.u32 %s232, 4
          %s243 = int_to_ptr.vmem [resolvable:$true] %s242
          %248 = dma.hbm_to_vmem [thread:$0]  %s241, 2048, %s243, %s229, 128, 128, 8
        $region36: #{tpu_custom_call.1} parent=31 // pred_fallthru
          _
        // Predicated region
        $region37: #{tpu_custom_call.1} parent=31 // pred_check
          %p249 = pneg %p78
        $region38: #{tpu_custom_call.1} parent=31 // pred_check_branch
          %251 = sbr.rel (%p249) target = $region40
        $region39: #{tpu_custom_call.1} parent=31 // pred_region
          %s252 = sand.u32 %s68, 1
          %s253 = scalar_lea.sflag [#allocation6], %s252
          %s254 = sand.u32 %s68, 1
          %s255 = smul.addr %s254, 128
          %s256 = scalar_lea.vmem [#allocation5], %s255
          %s257 = smul.u32 8, %s26
          %s259 = ssub.s32 2048, 2048
          %260 = vsyncadd %s253, %s259
          %s261 = smul.addr %s257, 2
          %s262 = smul.addr %s261, 128
          %s263 = scalar_lea.hbm %s1, %s262
          %s264 = sshll.u32 %s256, 4
          %s265 = int_to_ptr.vmem [resolvable:$true] %s264
          %270 = dma.hbm_to_vmem [thread:$0]  %s263, 2048, %s265, %s253, 128, 128, 8
        $region40: #{tpu_custom_call.1} parent=31 // pred_fallthru
          _
      $region32: #{tpu_custom_call.1} parent=5 // pred_fallthru
        _
      %p271 = scmp.le.s32.totalorder 1, %s18
      %p272 = scmp.lt.s32.totalorder %s18, 5
      %p273 = pnand %p271, %p272
      %p274 = pneg %p273
      // Predicated region
      $region41: #{tpu_custom_call.1} parent=5 // pred_check
        _
      $region42: #{tpu_custom_call.1} parent=5 // pred_check_branch
        %276 = sbr.rel (%p273) target = $region44
      $region43: #{tpu_custom_call.1} parent=5 // pred_region
        %s277 = ssub.s32 %s18, 1
        %s278 = sand.u32 %s45, 1
        %s279 = scalar_lea.sflag [#allocation4], %s278
        %s280 = sand.u32 %s45, 1
        %s281 = smul.addr %s280, 128
        %s282 = scalar_lea.vmem [#allocation3], %s281
        // Predicated region
        $region45: #{tpu_custom_call.1} parent=43 // pred_check
          %p283 = pneg %p58
        $region46: #{tpu_custom_call.1} parent=43 // pred_check_branch
          %285 = sbr.rel (%p283) target = $region48
        $region47: #{tpu_custom_call.1} parent=43 // pred_region
          %286 = dma.done %s279, 2048
        $region48: #{tpu_custom_call.1} parent=43 // pred_fallthru
          _
        %s287 = sand.u32 %s71, 1
        %s288 = scalar_lea.sflag [#allocation6], %s287
        %s289 = sand.u32 %s71, 1
        %s290 = smul.addr %s289, 128
        %s291 = scalar_lea.vmem [#allocation5], %s290
        // Predicated region
        $region49: #{tpu_custom_call.1} parent=43 // pred_check
          %p292 = pneg %p84
        $region50: #{tpu_custom_call.1} parent=43 // pred_check_branch
          %294 = sbr.rel (%p292) target = $region52
        $region51: #{tpu_custom_call.1} parent=43 // pred_region
          %295 = dma.done %s288, 2048
        $region52: #{tpu_custom_call.1} parent=43 // pred_fallthru
          _
        %s296 = sand.u32 %s45, 1
        %s297 = scalar_lea.sflag [#allocation4], %s296
        %s298 = sand.u32 %s45, 1
        %s299 = smul.addr %s298, 128
        %s300 = scalar_lea.vmem [#allocation3], %s299
        %p301 = pneg %p58
        %p302 = pneg %p55
        %s303 = sand.u32 %s71, 1
        %s304 = scalar_lea.sflag [#allocation6], %s303
        %s305 = sand.u32 %s71, 1
        %s306 = smul.addr %s305, 128
        %s307 = scalar_lea.vmem [#allocation5], %s306
        %p308 = pneg %p84
        %p309 = pneg %p81
        %p310 = pneg %p105
        %p311 = pneg %p102
        %p312 = pneg %p126
        %p313 = pneg %p123
        %p314 = pneg %p147
        %p315 = pneg %p144
        %p316 = pneg %p168
        %p317 = pneg %p165
        %p318 = pneg %p194
        %p319 = pneg %p191
        %p320 = scmp.lt.s32.totalorder %s27, 1
        %s321 = scalar_select %p320, %s27, 1
        %s322 = smul.addr %s321, 7
        %s323 = smul.addr %s322, 8
        %s324 = scalar_lea.vmem %s6, %s323
        %s325 = smul.u32 8, %s28
        %s326 = smul.u32 8, %s28
        %p327 = scmp.lt.s32.totalorder %s27, 1
        %s328 = scalar_select %p327, %s27, 1
        %s329 = smul.addr %s328, 7
        %s330 = smul.addr %s329, 8
        %s331 = scalar_lea.vmem %s6, %s330
        %p332 = scmp.eq.s32.totalorder %s28, 0
        // Predicated region
        $region53: #{tpu_custom_call.1} parent=43 // pred_check
          %p333 = pneg %p332
        $region54: #{tpu_custom_call.1} parent=43 // pred_check_branch
          %335 = sbr.rel (%p333) target = $region56
        $region55: #{tpu_custom_call.1} parent=43 // pred_region
          %vm336 = vcmask 130048
          %337 = vst.msk [vmem:[#allocation2] sm:$0xff] %vm336, 0.0
          %338 = vst.msk [vmem:[#allocation2 + $0x8] sm:$0xff] %vm336, 0.0
          %339 = vst.msk [vmem:[#allocation2 + $0x10] sm:$0xff] %vm336, 0.0
          %340 = vst.msk [vmem:[#allocation2 + $0x18] sm:$0xff] %vm336, 0.0
          %341 = vst.msk [vmem:[#allocation2 + $0x20] sm:$0xff] %vm336, 0.0
          %342 = vst.msk [vmem:[#allocation2 + $0x28] sm:$0xff] %vm336, 0.0
          %vm343 = vcmask 123904
          %344 = vst.msk [vmem:[#allocation2 + $0x30] sm:$0x3] %vm343, 0.0
        $region56: #{tpu_custom_call.1} parent=43 // pred_fallthru
          _
        %v345 = vld [vmem:[%s282] sm:$0xff]
        %v346 = vld [vmem:[%s282 + $0x8] sm:$0xff]
        %v347 = vld [vmem:[%s282 + $0x10] sm:$0xff]
        %v348 = vld [vmem:[%s282 + $0x18] sm:$0xff]
        %v349 = vld [vmem:[%s282 + $0x20] sm:$0xff]
        %v350 = vld [vmem:[%s282 + $0x28] sm:$0xff]
        %v351 = vld [vmem:[%s282 + $0x30] sm:$0xff]
        %v352 = vld [vmem:[%s282 + $0x38] sm:$0xff]
        %v353 = vld [vmem:[%s282 + $0x40] sm:$0xff]
        %v354 = vld [vmem:[%s282 + $0x48] sm:$0xff]
        %v355 = vld [vmem:[%s282 + $0x50] sm:$0xff]
        %v356 = vld [vmem:[%s282 + $0x58] sm:$0xff]
        %v357 = vld [vmem:[%s282 + $0x60] sm:$0xff]
        %v358 = vld [vmem:[%s282 + $0x68] sm:$0xff]
        %v359 = vld [vmem:[%s282 + $0x70] sm:$0xff]
        %v360 = vld [vmem:[%s282 + $0x78] sm:$0xff]
        %v361 = vld [vmem:[%s291] sm:$0xff]
        %v362 = vld [vmem:[%s291 + $0x8] sm:$0xff]
        %v363 = vld [vmem:[%s291 + $0x10] sm:$0xff]
        %v364 = vld [vmem:[%s291 + $0x18] sm:$0xff]
        %v365 = vld [vmem:[%s291 + $0x20] sm:$0xff]
        %v366 = vld [vmem:[%s291 + $0x28] sm:$0xff]
        %v367 = vld [vmem:[%s291 + $0x30] sm:$0xff]
        %v368 = vld [vmem:[%s291 + $0x38] sm:$0xff]
        %v369 = vld [vmem:[%s291 + $0x40] sm:$0xff]
        %v370 = vld [vmem:[%s291 + $0x48] sm:$0xff]
        %v371 = vld [vmem:[%s291 + $0x50] sm:$0xff]
        %v372 = vld [vmem:[%s291 + $0x58] sm:$0xff]
        %v373 = vld [vmem:[%s291 + $0x60] sm:$0xff]
        %v374 = vld [vmem:[%s291 + $0x68] sm:$0xff]
        %v375 = vld [vmem:[%s291 + $0x70] sm:$0xff]
        %v376 = vld [vmem:[%s291 + $0x78] sm:$0xff]
        %v377 = vld [vmem:[#allocation2] sm:$0xff]
        %v378 = vld [vmem:[#allocation2 + $0x8] sm:$0xff]
        %v379 = vld [vmem:[#allocation2 + $0x10] sm:$0xff]
        %v380 = vld [vmem:[#allocation2 + $0x18] sm:$0xff]
        %v381 = vld [vmem:[#allocation2 + $0x20] sm:$0xff]
        %v382 = vld [vmem:[#allocation2 + $0x28] sm:$0xff]
        %v383 = vld [vmem:[#allocation2 + $0x30] sm:$0x3]
        %384 = vxpose.xlu0.b32.start [1/16] %v361, 128
        %385 = vxpose.xlu0.b32.cont [2/16] %v362, 128
        %386 = vxpose.xlu0.b32.cont [3/16] %v363, 128
        %387 = vxpose.xlu0.b32.cont [4/16] %v364, 128
        %388 = vxpose.xlu0.b32.cont [5/16] %v365, 128
        %389 = vxpose.xlu0.b32.cont [6/16] %v366, 128
        %390 = vxpose.xlu0.b32.cont [7/16] %v367, 128
        %391 = vxpose.xlu0.b32.cont [8/16] %v368, 128
        %392 = vxpose.xlu0.b32.cont [9/16] %v369, 128
        %393 = vxpose.xlu0.b32.cont [10/16] %v370, 128
        %394 = vxpose.xlu0.b32.cont [11/16] %v371, 128
        %395 = vxpose.xlu0.b32.cont [12/16] %v372, 128
        %396 = vxpose.xlu0.b32.cont [13/16] %v373, 128
        %397 = vxpose.xlu0.b32.cont [14/16] %v374, 128
        %398 = vxpose.xlu0.b32.cont [15/16] %v375, 128
        %399 = vxpose.xlu0.b32.end [16/16] %v376, 128
        %v400 = vpop.trf.xlu0
        %v401 = vpop.trf.xlu0
        %v402 = vpop.trf.xlu0
        %v403 = vpop.trf.xlu0
        %v404 = vpop.trf.xlu0
        %v405 = vpop.trf.xlu0
        %v406 = vpop.trf.xlu0
        %v407 = vpop.trf.xlu0
        %v408 = vpop.trf.xlu0
        %v409 = vpop.trf.xlu0
        %v410 = vpop.trf.xlu0
        %v411 = vpop.trf.xlu0
        %v412 = vpop.trf.xlu0
        %v413 = vpop.trf.xlu0
        %v414 = vpop.trf.xlu0
        %v415 = vpop.trf.xlu0
        %416 = vmatprep.subr.mxu0 0.0
        %417 = vmatpush1.msra.mxu0 %v360
        %418 = vmatprep.subr.mxu0 0.0
        %419 = vmatpush1.msra.mxu0 %v359
        %420 = vmatprep.subr.mxu0 0.0
        %421 = vmatpush1.msra.mxu0 %v358
        %422 = vmatprep.subr.mxu0 0.0
        %423 = vmatpush1.msra.mxu0 %v357
        %424 = vmatprep.subr.mxu0 0.0
        %425 = vmatpush1.msra.mxu0 %v356
        %426 = vmatprep.subr.mxu0 0.0
        %427 = vmatpush1.msra.mxu0 %v355
        %428 = vmatprep.subr.mxu0 0.0
        %429 = vmatpush1.msra.mxu0 %v354
        %430 = vmatprep.subr.mxu0 0.0
        %431 = vmatpush1.msra.mxu0 %v353
        %432 = vmatprep.subr.mxu0 0.0
        %433 = vmatpush1.msra.mxu0 %v352
        %434 = vmatprep.subr.mxu0 0.0
        %435 = vmatpush1.msra.mxu0 %v351
        %436 = vmatprep.subr.mxu0 0.0
        %437 = vmatpush1.msra.mxu0 %v350
        %438 = vmatprep.subr.mxu0 0.0
        %439 = vmatpush1.msra.mxu0 %v349
        %440 = vmatprep.subr.mxu0 0.0
        %441 = vmatpush1.msra.mxu0 %v348
        %442 = vmatprep.subr.mxu0 0.0
        %443 = vmatpush1.msra.mxu0 %v347
        %444 = vmatprep.subr.mxu0 0.0
        %445 = vmatpush1.msra.mxu0 %v346
        %446 = vmatprep.subr.mxu0 0.0
        %447 = vmatpush1.msra.mxu0 %v345
        %448 = vmatprep.subr.mxu0 0.0
        %449 = vmatpush2.msra.mxu0 0.0
        %450 = vmatprep.subr.mxu0 0.0
        %451 = vmatpush2.msra.mxu0 0.0
        %452 = vmatprep.subr.mxu0 0.0
        %453 = vmatpush2.msra.mxu0 0.0
        %454 = vmatprep.subr.mxu0 0.0
        %455 = vmatpush2.msra.mxu0 0.0
        %456 = vmatprep.subr.mxu0 0.0
        %457 = vmatpush2.msra.mxu0 0.0
        %458 = vmatprep.subr.mxu0 0.0
        %459 = vmatpush2.msra.mxu0 0.0
        %460 = vmatprep.subr.mxu0 0.0
        %461 = vmatpush2.msra.mxu0 0.0
        %462 = vmatprep.subr.mxu0 0.0
        %463 = vmatpush2.msra.mxu0 0.0
        %464 = vmatprep.subr.mxu0 0.0
        %465 = vmatpush2.msra.mxu0 0.0
        %466 = vmatprep.subr.mxu0 0.0
        %467 = vmatpush2.msra.mxu0 0.0
        %468 = vmatprep.subr.mxu0 0.0
        %469 = vmatpush2.msra.mxu0 0.0
        %470 = vmatprep.subr.mxu0 0.0
        %471 = vmatpush2.msra.mxu0 0.0
        %472 = vmatprep.subr.mxu0 0.0
        %473 = vmatpush2.msra.mxu0 0.0
        %474 = vmatprep.subr.mxu0 0.0
        %475 = vmatpush2.msra.mxu0 0.0
        %476 = vmatprep.subr.mxu0 0.0
        %477 = vmatpush2.msra.mxu0 0.0
        %478 = vmatprep.subr.mxu0 0.0
        %479 = vmatpush2.msra.mxu0 0.0
        %480 = vmatprep.mubr.f32.mxu0 0.0
        %481 = vmatmul.mubr.f32.gmra.mxu0 %v400
        %v482 = vpop.f32.mrf.mxu0
        %v483 = vadd.f32 0.0, %v482
        %v484 = vpop.f32.mrf.mxu0
        %485 = vmatprep.mubr.f32.mxu0 0.0
        %486 = vmatmul.mubr.f32.gmra.mxu0 %v401
        %v487 = vpop.f32.mrf.mxu0
        %v488 = vadd.f32 0.0, %v487
        %v489 = vpop.f32.mrf.mxu0
        %490 = vmatprep.mubr.f32.mxu0 0.0
        %491 = vmatmul.mubr.f32.gmra.mxu0 %v402
        %v492 = vpop.f32.mrf.mxu0
        %v493 = vadd.f32 0.0, %v492
        %v494 = vpop.f32.mrf.mxu0
        %495 = vmatprep.mubr.f32.mxu0 0.0
        %496 = vmatmul.mubr.f32.gmra.mxu0 %v403
        %v497 = vpop.f32.mrf.mxu0
        %v498 = vadd.f32 0.0, %v497
        %v499 = vpop.f32.mrf.mxu0
        %500 = vmatprep.mubr.f32.mxu0 0.0
        %501 = vmatmul.mubr.f32.gmra.mxu0 %v404
        %v502 = vpop.f32.mrf.mxu0
        %v503 = vadd.f32 0.0, %v502
        %v504 = vpop.f32.mrf.mxu0
        %505 = vmatprep.mubr.f32.mxu0 0.0
        %506 = vmatmul.mubr.f32.gmra.mxu0 %v405
        %v507 = vpop.f32.mrf.mxu0
        %v508 = vadd.f32 0.0, %v507
        %v509 = vpop.f32.mrf.mxu0
        %510 = vmatprep.mubr.f32.mxu0 0.0
        %511 = vmatmul.mubr.f32.gmra.mxu0 %v406
        %v512 = vpop.f32.mrf.mxu0
        %v513 = vadd.f32 0.0, %v512
        %v514 = vpop.f32.mrf.mxu0
        %515 = vdwg.mxu0
        %v516 = vadd.f32 %v377, %v483
        %v517 = vadd.f32 %v378, %v488
        %v518 = vadd.f32 %v379, %v493
        %v519 = vadd.f32 %v380, %v498
        %v520 = vadd.f32 %v381, %v503
        %v521 = vadd.f32 %v382, %v508
        %v522 = vadd.f32 %v383, %v513
        %vm523 = vcmask 130048
        %524 = vst.msk [vmem:[#allocation2] sm:$0xff] %vm523, %v516
        %525 = vst.msk [vmem:[#allocation2 + $0x8] sm:$0xff] %vm523, %v517
        %526 = vst.msk [vmem:[#allocation2 + $0x10] sm:$0xff] %vm523, %v518
        %527 = vst.msk [vmem:[#allocation2 + $0x18] sm:$0xff] %vm523, %v519
        %528 = vst.msk [vmem:[#allocation2 + $0x20] sm:$0xff] %vm523, %v520
        %529 = vst.msk [vmem:[#allocation2 + $0x28] sm:$0xff] %vm523, %v521
        %vm530 = vcmask 123904
        %531 = vst.msk [vmem:[#allocation2 + $0x30] sm:$0x3] %vm530, %v522
        %p532 = scmp.eq.s32.totalorder %s28, 1
        // Predicated region
        $region57: #{tpu_custom_call.1} parent=43 // pred_check
          %p533 = pneg %p532
        $region58: #{tpu_custom_call.1} parent=43 // pred_check_branch
          %535 = sbr.rel (%p533) target = $region60
        $region59: #{tpu_custom_call.1} parent=43 // pred_region
          %v536 = vld [vmem:[#allocation2] sm:$0xff]
          %v537 = vld [vmem:[#allocation2 + $0x8] sm:$0xff]
          %v538 = vld [vmem:[#allocation2 + $0x10] sm:$0xff]
          %v539 = vld [vmem:[#allocation2 + $0x18] sm:$0xff]
          %v540 = vld [vmem:[#allocation2 + $0x20] sm:$0xff]
          %v541 = vld [vmem:[#allocation2 + $0x28] sm:$0xff]
          %v542 = vld [vmem:[#allocation2 + $0x30] sm:$0x3]
          %v543 = vld [vmem:[%s2] sm:$0xff]
          %v544 = vld [vmem:[%s2 + $0x8] sm:$0xff]
          %v546 = vsel %vm523, %v536, 0
          %v549 = vsel %vm523, %v537, 0
          %v552 = vsel %vm523, %v538, 0
          %v555 = vsel %vm523, %v539, 0
          %v558 = vsel %vm523, %v540, 0
          %v561 = vsel %vm523, %v541, 0
          %v564 = vsel %vm523, %v542, 0
          %566 = vmatprep.subr.mxu0 0.0
          %567 = vmatpush1.msra.mxu0 0.0
          %568 = vmatprep.subr.mxu0 0.0
          %569 = vmatpush1.msra.mxu0 0.0
          %570 = vmatprep.subr.mxu0 0.0
          %571 = vmatpush1.msra.mxu0 0.0
          %572 = vmatprep.subr.mxu0 0.0
          %573 = vmatpush1.msra.mxu0 0.0
          %574 = vmatprep.subr.mxu0 0.0
          %575 = vmatpush1.msra.mxu0 0.0
          %576 = vmatprep.subr.mxu0 0.0
          %577 = vmatpush1.msra.mxu0 0.0
          %578 = vmatprep.subr.mxu0 0.0
          %579 = vmatpush1.msra.mxu0 0.0
          %580 = vmatprep.subr.mxu0 0.0
          %581 = vmatpush1.msra.mxu0 0.0
          %582 = vmatprep.subr.mxu0 0.0
          %583 = vmatpush1.msra.mxu0 0.0
          %584 = vmatprep.subr.mxu0 0.0
          %585 = vmatpush1.msra.mxu0 0.0
          %586 = vmatprep.subr.mxu0 0.0
          %587 = vmatpush1.msra.mxu0 0.0
          %588 = vmatprep.subr.mxu0 0.0
          %589 = vmatpush1.msra.mxu0 0.0
          %590 = vmatprep.subr.mxu0 0.0
          %591 = vmatpush1.msra.mxu0 0.0
          %592 = vmatprep.subr.mxu0 0.0
          %593 = vmatpush1.msra.mxu0 0.0
          %594 = vmatprep.subr.mxu0 0.0
          %595 = vmatpush1.msra.mxu0 %v544
          %596 = vmatprep.subr.mxu0 0.0
          %597 = vmatpush1.msra.mxu0 %v543
          %598 = vmatprep.subr.mxu0 0.0
          %599 = vmatpush2.msra.mxu0 0.0
          %600 = vmatprep.subr.mxu0 0.0
          %601 = vmatpush2.msra.mxu0 0.0
          %602 = vmatprep.subr.mxu0 0.0
          %603 = vmatpush2.msra.mxu0 0.0
          %604 = vmatprep.subr.mxu0 0.0
          %605 = vmatpush2.msra.mxu0 0.0
          %606 = vmatprep.subr.mxu0 0.0
          %607 = vmatpush2.msra.mxu0 0.0
          %608 = vmatprep.subr.mxu0 0.0
          %609 = vmatpush2.msra.mxu0 0.0
          %610 = vmatprep.subr.mxu0 0.0
          %611 = vmatpush2.msra.mxu0 0.0
          %612 = vmatprep.subr.mxu0 0.0
          %613 = vmatpush2.msra.mxu0 0.0
          %614 = vmatprep.subr.mxu0 0.0
          %615 = vmatpush2.msra.mxu0 0.0
          %616 = vmatprep.subr.mxu0 0.0
          %617 = vmatpush2.msra.mxu0 0.0
          %618 = vmatprep.subr.mxu0 0.0
          %619 = vmatpush2.msra.mxu0 0.0
          %620 = vmatprep.subr.mxu0 0.0
          %621 = vmatpush2.msra.mxu0 0.0
          %622 = vmatprep.subr.mxu0 0.0
          %623 = vmatpush2.msra.mxu0 0.0
          %624 = vmatprep.subr.mxu0 0.0
          %625 = vmatpush2.msra.mxu0 0.0
          %626 = vmatprep.subr.mxu0 0.0
          %627 = vmatpush2.msra.mxu0 0.0
          %628 = vmatprep.subr.mxu0 0.0
          %629 = vmatpush2.msra.mxu0 0.0
          %630 = vmatprep.mubr.f32.mxu0 0.0
          %631 = vmatmul.mubr.f32.gmra.mxu0 %v546
          %v632 = vpop.f32.mrf.mxu0
          %v633 = vadd.f32 0.0, %v632
          %v634 = vpop.f32.mrf.mxu0
          %635 = vmatprep.mubr.f32.mxu0 0.0
          %636 = vmatmul.mubr.f32.gmra.mxu0 %v549
          %v637 = vpop.f32.mrf.mxu0
          %v638 = vadd.f32 0.0, %v637
          %v639 = vpop.f32.mrf.mxu0
          %640 = vmatprep.mubr.f32.mxu0 0.0
          %641 = vmatmul.mubr.f32.gmra.mxu0 %v552
          %v642 = vpop.f32.mrf.mxu0
          %v643 = vadd.f32 0.0, %v642
          %v644 = vpop.f32.mrf.mxu0
          %645 = vmatprep.mubr.f32.mxu0 0.0
          %646 = vmatmul.mubr.f32.gmra.mxu0 %v555
          %v647 = vpop.f32.mrf.mxu0
          %v648 = vadd.f32 0.0, %v647
          %v649 = vpop.f32.mrf.mxu0
          %650 = vmatprep.mubr.f32.mxu0 0.0
          %651 = vmatmul.mubr.f32.gmra.mxu0 %v558
          %v652 = vpop.f32.mrf.mxu0
          %v653 = vadd.f32 0.0, %v652
          %v654 = vpop.f32.mrf.mxu0
          %655 = vmatprep.mubr.f32.mxu0 0.0
          %656 = vmatmul.mubr.f32.gmra.mxu0 %v561
          %v657 = vpop.f32.mrf.mxu0
          %v658 = vadd.f32 0.0, %v657
          %v659 = vpop.f32.mrf.mxu0
          %660 = vmatprep.mubr.f32.mxu0 0.0
          %661 = vmatmul.mubr.f32.gmra.mxu0 %v564
          %v662 = vpop.f32.mrf.mxu0
          %v663 = vadd.f32 0.0, %v662
          %v664 = vpop.f32.mrf.mxu0
          %665 = vdwg.mxu0
          %v666 = vld [vmem:[%s3] sm:$0x1]
          %v668 = vlaneseq
          %v669 = vshrl.u32 %v668, 7
          %v670 = vsub.s32 0, %v669
          %v671 = vrot.slane %v666, %v670
          %v673 = vmul.f32 %v633, %v671
          %v674 = vmul.f32 %v638, %v671
          %v675 = vmul.f32 %v643, %v671
          %v676 = vmul.f32 %v648, %v671
          %v677 = vmul.f32 %v653, %v671
          %v678 = vmul.f32 %v658, %v671
          %v679 = vmul.f32 %v663, %v671
          %v680 = vld [vmem:[%s4] sm:$0x1]
          %v682 = vlaneseq
          %v683 = vshrl.u32 %v682, 7
          %v684 = vsub.s32 0, %v683
          %v685 = vrot.slane %v680, %v684
          %v687 = vadd.f32 %v673, %v685
          %v688 = vadd.f32 %v674, %v685
          %v689 = vadd.f32 %v675, %v685
          %v690 = vadd.f32 %v676, %v685
          %v691 = vadd.f32 %v677, %v685
          %v692 = vadd.f32 %v678, %v685
          %v693 = vadd.f32 %v679, %v685
          %v694 = vmax.f32 %v687, 0.0
          %v695 = vmax.f32 %v688, 0.0
          %v696 = vmax.f32 %v689, 0.0
          %v697 = vmax.f32 %v690, 0.0
          %v698 = vmax.f32 %v691, 0.0
          %v699 = vmax.f32 %v692, 0.0
          %v700 = vmax.f32 %v693, 0.0
          %v701 = vld [vmem:[%s5] sm:$0xff]
          %v702 = vld [vmem:[%s5 + $0x8] sm:$0xff]
          %v703 = vld [vmem:[%s5 + $0x10] sm:$0xff]
          %v704 = vld [vmem:[%s5 + $0x18] sm:$0xff]
          %v705 = vld [vmem:[%s5 + $0x20] sm:$0xff]
          %v706 = vld [vmem:[%s5 + $0x28] sm:$0xff]
          %v707 = vld [vmem:[%s5 + $0x30] sm:$0x3]
          %v708 = vmul.f32 %v694, %v701
          %v709 = vmul.f32 %v695, %v702
          %v710 = vmul.f32 %v696, %v703
          %v711 = vmul.f32 %v697, %v704
          %v712 = vmul.f32 %v698, %v705
          %v713 = vmul.f32 %v699, %v706
          %v714 = vmul.f32 %v700, %v707
          %715 = vst.msk [vmem:[%s331] sm:$0xff] %vm523, %v708
          %716 = vst.msk [vmem:[%s331 + $0x8] sm:$0xff] %vm523, %v709
          %717 = vst.msk [vmem:[%s331 + $0x10] sm:$0xff] %vm523, %v710
          %718 = vst.msk [vmem:[%s331 + $0x18] sm:$0xff] %vm523, %v711
          %719 = vst.msk [vmem:[%s331 + $0x20] sm:$0xff] %vm523, %v712
          %720 = vst.msk [vmem:[%s331 + $0x28] sm:$0xff] %vm523, %v713
          %721 = vst.msk [vmem:[%s331 + $0x30] sm:$0x3] %vm530, %v714
        $region60: #{tpu_custom_call.1} parent=43 // pred_fallthru
          _
        %p722 = scmp.lt.s32.totalorder %s27, 1
        %s723 = scalar_select %p722, %s27, 1
        %s724 = smul.addr %s723, 7
        %s725 = smul.addr %s724, 8
        %s726 = scalar_lea.vmem %s6, %s725
        // Predicated region
        $region61: #{tpu_custom_call.1} parent=43 // pred_check
          %p727 = pneg %p191
        $region62: #{tpu_custom_call.1} parent=43 // pred_check_branch
          %729 = sbr.rel (%p727) target = $region64
        $region63: #{tpu_custom_call.1} parent=43 // pred_region
          _
        $region64: #{tpu_custom_call.1} parent=43 // pred_fallthru
          _
      $region44: #{tpu_custom_call.1} parent=5 // pred_fallthru
        _
      %p730 = scmp.le.s32.totalorder 2, %s18
      // Predicated region
      $region65: #{tpu_custom_call.1} parent=5 // pred_check
        %p731 = pneg %p730
      $region66: #{tpu_custom_call.1} parent=5 // pred_check_branch
        %733 = sbr.rel (%p731) target = $region68
      $region67: #{tpu_custom_call.1} parent=5 // pred_region
        %s734 = ssub.s32 %s18, 2
        // Predicated region
        $region69: #{tpu_custom_call.1} parent=67 // pred_check
          %p735 = pneg %p197
        $region70: #{tpu_custom_call.1} parent=67 // pred_check_branch
          %737 = sbr.rel (%p735) target = $region72
        $region71: #{tpu_custom_call.1} parent=67 // pred_region
          %p738 = scmp.lt.s32.totalorder %s29, 1
          %s739 = scalar_select %p738, %s29, 1
          %s740 = smul.addr %s739, 7
          %s741 = smul.addr %s740, 8
          %s742 = scalar_lea.vmem %s6, %s741
        $region72: #{tpu_custom_call.1} parent=67 // pred_fallthru
          _
      $region68: #{tpu_custom_call.1} parent=5 // pred_fallthru
        _
    $region6: #{tpu_custom_call.1} parent=1 // loop_footer
      %s22 = sadd.s32 1, %s18
    $region7: #{tpu_custom_call.1} parent=1 // loop_footer_branch
      %17 = sbr.rel target = $region3
    $region8: #{tpu_custom_call.1} parent=1 // loop_exit
      _
    %743 = vsyncpa [#allocation4], 1
    %s744 = scalar_lea.sflag [#allocation4], 1
    %745 = vsyncpa %s744, 1
    %746 = vsyncpa [#allocation6], 1
    %s747 = scalar_lea.sflag [#allocation6], 1
    %748 = vsyncpa %s747, 1

</llo_original>
